<compile_context>
chip_gen: v6e
topology: v6e:2x2x1
jax: 0.10.0
libtpu: 0.0.40
codegen_flags: <defaults>
</compile_context>

<pallas_src>
import functools

import jax
import jax.numpy as jnp
from jax import lax
from jax.experimental import pallas as pl
from jax.experimental.pallas import tpu as pltpu


_LANE = 128
_VMEM_LIMIT_BYTES = 48 * 1024 * 1024   # safe on v5e/v6e (128 MiB) and v7x (64 MiB)
_VMEM_BUDGET_BYTES = 36 * 1024 * 1024  # headroom under the scoped limit


def _round_up(x, m):
    return ((x + m - 1) // m) * m


# ----------------------------- Pass 1: Q/K/V projection ------------------------

def _proj_kernel(x_ref, w_ref, b_ref, q_ref, k_ref, v_ref, *, crp):
    """x_ref: (1, TN, Cp) f32; w_ref: (Cp, 2*CRp+Cp) bf16; b_ref: (1, 2*CRp+Cp) f32."""
    x = x_ref[0].astype(jnp.bfloat16)                          # (TN, Cp)
    h = jnp.dot(x, w_ref[...], preferred_element_type=jnp.float32) + b_ref[...]
    h = jnp.maximum(h, 0.0).astype(jnp.bfloat16)               # (TN, 2*CRp+Cp)
    # Lane-aligned slices: crp and Cp are multiples of 128, so no cross-lane
    # relayout is needed.
    q_ref[0] = h[:, :crp]
    k_ref[0] = h[:, crp:2 * crp]
    v_ref[0] = h[:, 2 * crp:]


# ----------------------------- Pass 2: attention + residual --------------------

def _attn_kernel(q_ref, k_ref, v_ref, xq_ref, out_ref, *, n_valid, n_pad):
    q = q_ref[0]                                               # (TQ, CRp)  bf16
    k = k_ref[0]                                               # (N_pad, CRp) bf16
    v = v_ref[0]                                               # (N_pad, Cp) bf16

    # Scores e[i, j] = sum_c q[i, c] * k[j, c]; explicit bf16 operands, f32 acc.
    e = lax.dot_general(q, k, dimension_numbers=(((1,), (1,)), ((), ())),
                        preferred_element_type=jnp.float32)    # (TQ, N_pad)
    if n_valid < n_pad:                                        # static branch
        col = lax.broadcasted_iota(jnp.int32, e.shape, 1)
        e = jnp.where(col < n_valid, e, -1e30)                 # mask padded keys

    # Softmax over keys with deferred normalization.
    m = jnp.max(e, axis=-1, keepdims=True)
    p = jnp.exp(e - m)                                         # unnormalized
    l = jnp.sum(p, axis=-1, keepdims=True)

    # Attention in canonical (TQ, N) @ (N, Cp) form, then scale the small
    # (TQ, Cp) result by 1/l (EUP approx reciprocal) and add the residual.
    att = jnp.dot(p.astype(jnp.bfloat16), v,
                  preferred_element_type=jnp.float32)          # (TQ, Cp)
    out_ref[0] = xq_ref[0] + att * pl.reciprocal(l, approx=True)


# ----------------------------- Tiling / wrapper --------------------------------

def _pick_query_tile(n, crp, cp):
    """Largest TQ in {512, 256, 128} whose pass-2 footprint fits the VMEM budget."""
    n_base = _round_up(n, _LANE)

    def footprint(tq, n_pad):
        kv = 2 * n_pad * (crp + cp) * 2                 # K,V bf16, double-buffered
        blocks = 2 * (tq * crp * 2 + 2 * tq * cp * 4)   # Q / x / out blocks
        scores = tq * n_pad * (4 + 2) + tq * cp * 4     # e,p f32 + p bf16 + att
        return kv + blocks + scores

    tq = min(512, n_base)
    while tq > 128 and footprint(tq, _round_up(n, tq)) > _VMEM_BUDGET_BYTES:
        tq //= 2
    # TODO(synk): for very large N where even TQ=128 overflows the budget,
    # switch to a flash-style online-softmax kernel blocked over keys.
    return tq


def point_attention_forward(x, w1, b1, w2, b2, w3, b3):
    """x: (B, C, N) f32.  w*: folded conv+BN weights (Cout, C).  b*: (Cout,)."""
    B, C, N = x.shape
    Cr = w1.shape[0]
    Cp = _round_up(C, _LANE)
    CRp = _round_up(Cr, _LANE)

    TQ = _pick_query_tile(N, CRp, Cp)
    N_pad = _round_up(N, TQ)
    TN = TQ                                    # pass-1 point tile

    # Layout plumbing done once in the wrapper: point-major x, zero-padded to
    # lane-aligned channel widths; pre-transposed, stacked, zero-padded weights.
    # TODO(synk): if this module is stacked / fed by other point-major ops, keep
    # the (B, N, C) layout between layers to avoid these full-tensor transposes.
    x_t = jnp.transpose(x, (0, 2, 1)).astype(jnp.float32)                 # (B, N, C)
    x_t = jnp.pad(x_t, ((0, 0), (0, N_pad - N), (0, Cp - C)))             # (B, N_pad, Cp)

    def pad_wt(w, cout_pad):   # (Cout, C) -> (Cp, cout_pad), transposed, zero pad
        wt = jnp.transpose(w)
        return jnp.pad(wt, ((0, Cp - C), (0, cout_pad - w.shape[0])))

    def pad_b(b, cout_pad):
        return jnp.pad(b, (0, cout_pad - b.shape[0]))

    w_qkv = jnp.concatenate(
        [pad_wt(w1, CRp), pad_wt(w2, CRp), pad_wt(w3, Cp)], axis=1
    ).astype(jnp.bfloat16)                                                # (Cp, 2*CRp+Cp)
    b_qkv = jnp.concatenate(
        [pad_b(b1, CRp), pad_b(b2, CRp), pad_b(b3, Cp)]
    ).reshape(1, 2 * CRp + Cp).astype(jnp.float32)

    # ---------------- Pass 1: Q/K/V projection, once per point -----------------
    q_all, k_all, v_all = pl.pallas_call(
        functools.partial(_proj_kernel, crp=CRp),
        out_shape=(
            jax.ShapeDtypeStruct((B, N_pad, CRp), jnp.bfloat16),
            jax.ShapeDtypeStruct((B, N_pad, CRp), jnp.bfloat16),
            jax.ShapeDtypeStruct((B, N_pad, Cp), jnp.bfloat16),
        ),
        grid_spec=pltpu.PrefetchScalarGridSpec(
            num_scalar_prefetch=0,
            grid=(B, N_pad // TN),
            in_specs=[
                pl.BlockSpec((1, TN, Cp), lambda b, i: (b, i, 0)),         # x^T tile
                pl.BlockSpec((Cp, 2 * CRp + Cp), lambda b, i: (0, 0)),     # [W1|W2|W3]^T
                pl.BlockSpec((1, 2 * CRp + Cp), lambda b, i: (0, 0)),      # biases
            ],
            out_specs=[
                pl.BlockSpec((1, TN, CRp), lambda b, i: (b, i, 0)),        # Q
                pl.BlockSpec((1, TN, CRp), lambda b, i: (b, i, 0)),        # K
                pl.BlockSpec((1, TN, Cp), lambda b, i: (b, i, 0)),         # V
            ],
        ),
        compiler_params=pltpu.CompilerParams(
            dimension_semantics=("parallel", "parallel"),
            vmem_limit_bytes=_VMEM_LIMIT_BYTES),
    )(x_t, w_qkv, b_qkv)

    # ---------------- Pass 2: attention + residual, tiled over queries ---------
    out_t = pl.pallas_call(
        functools.partial(_attn_kernel, n_valid=N, n_pad=N_pad),
        out_shape=jax.ShapeDtypeStruct((B, N_pad, Cp), jnp.float32),
        grid_spec=pltpu.PrefetchScalarGridSpec(
            num_scalar_prefetch=0,
            grid=(B, N_pad // TQ),
            in_specs=[
                pl.BlockSpec((1, TQ, CRp), lambda b, q: (b, q, 0)),        # Q tile
                pl.BlockSpec((1, N_pad, CRp), lambda b, q: (b, 0, 0)),     # K (all pts)
                pl.BlockSpec((1, N_pad, Cp), lambda b, q: (b, 0, 0)),      # V (all pts)
                pl.BlockSpec((1, TQ, Cp), lambda b, q: (b, q, 0)),         # residual rows
            ],
            out_specs=pl.BlockSpec((1, TQ, Cp), lambda b, q: (b, q, 0)),
        ),
        compiler_params=pltpu.CompilerParams(
            dimension_semantics=("parallel", "parallel"),
            vmem_limit_bytes=_VMEM_LIMIT_BYTES),
    )(q_all, k_all, v_all, x_t)

    return jnp.transpose(out_t[:, :N, :C], (0, 2, 1))          # back to (B, C, N)


# ----------------------------- Param folding & reference -----------------------

def fold_conv_bn(w_conv, gamma, beta, mean, var, eps=1e-5):
    # Conv1d(k=1, bias=False) weight (Cout, Cin, 1) folded with eval-mode BN.
    scale = gamma / jnp.sqrt(var + eps)
    w_eff = scale[:, None] * w_conv[:, :, 0]      # (Cout, Cin)
    b_eff = beta - scale * mean                   # (Cout,)
    return w_eff.astype(jnp.float32), b_eff.astype(jnp.float32)


def reference_forward(x, w1, b1, w2, b2, w3, b3):
    a = jnp.maximum(jnp.einsum("oc,bcn->bon", w1, x) + b1[None, :, None], 0.0)
    b = jnp.maximum(jnp.einsum("oc,bcn->bon", w2, x) + b2[None, :, None], 0.0)
    d = jnp.maximum(jnp.einsum("oc,bcn->bon", w3, x) + b3[None, :, None], 0.0)
    e = jnp.einsum("bci,bcj->bij", a, b)                                  # (B,N,N)
    s = jax.nn.softmax(e, axis=-1)
    return x + jnp.einsum("bcj,bij->bci", d, s)


# ----------------------------- Test harness -------------------------------------

def _make_case(key, B, C, N, ratio=8):
    Cr = C // ratio
    keys = jax.random.split(key, 16)
    x = jax.random.normal(keys[0], (B, C, N), dtype=jnp.float32)
    wc1 = jax.random.normal(keys[1], (Cr, C, 1), dtype=jnp.float32) * 0.05
    wc2 = jax.random.normal(keys[2], (Cr, C, 1), dtype=jnp.float32) * 0.05
    wc3 = jax.random.normal(keys[3], (C, C, 1), dtype=jnp.float32) * 0.05

    def bn(k0, k1, k2, k3, n):
        g = jax.random.uniform(k0, (n,), minval=0.5, maxval=1.5)
        be = jax.random.normal(k1, (n,)) * 0.1
        m = jax.random.normal(k2, (n,)) * 0.1
        v = jax.random.uniform(k3, (n,), minval=0.5, maxval=1.5)
        return g, be, m, v

    w1, b1 = fold_conv_bn(wc1, *bn(keys[4], keys[5], keys[6], keys[7], Cr))
    w2, b2 = fold_conv_bn(wc2, *bn(keys[8], keys[9], keys[10], keys[11], Cr))
    w3, b3 = fold_conv_bn(wc3, *bn(keys[12], keys[13], keys[14], keys[15], C))
    return x, (w1, b1, w2, b2, w3, b3)


if __name__ == "__main__":
    root = jax.random.PRNGKey(0)
    k1, k2 = jax.random.split(root)

    # Case 1: B=2, C=64, N=128 (channel padding 64->128 and Cr 8->128 exercised).
    x, params = _make_case(k1, B=2, C=64, N=128)
    out = jax.block_until_ready(point_attention_forward(x, *params))
    ref = reference_forward(x, *params)
    assert out.shape == x.shape
    # bf16 MXU operands + approx reciprocal in the softmax denominator =>
    # looser tolerance than pure-f32 (documented numerics choice).
    assert jnp.allclose(out, ref, atol=3e-2, rtol=3e-2), "case 1 mismatch vs reference"

    # Case 2: B=1, C=32, N=100 (N not a multiple of 128 -> key-masking path).
    x2, params2 = _make_case(k2, B=1, C=32, N=100)
    out2 = jax.block_until_ready(point_attention_forward(x2, *params2))
    ref2 = reference_forward(x2, *params2)
    assert out2.shape == x2.shape
    assert jnp.allclose(out2, ref2, atol=3e-2, rtol=3e-2), "case 2 mismatch vs reference"

    print("KERNEL_OK")
</pallas_src>

<mosaic_0001>
module attributes {stable_mosaic.version = 11 : i64} {
  func.func @_proj_kernel(%arg0: i32, %arg1: i32, %arg2: memref<1x128x128xf32, #tpu.memory_space<vmem>>, %arg3: memref<128x384xbf16, #tpu.memory_space<vmem>>, %arg4: memref<1x384xf32, #tpu.memory_space<vmem>>, %arg5: memref<1x128x128xbf16, #tpu.memory_space<vmem>>, %arg6: memref<1x128x128xbf16, #tpu.memory_space<vmem>>, %arg7: memref<1x128x128xbf16, #tpu.memory_space<vmem>>) attributes {dimension_semantics = [#tpu.dimension_semantics<parallel>, #tpu.dimension_semantics<parallel>], iteration_bounds = array<i64: 2, 1>, scalar_prefetch = 0 : i64, scratch_operands = 0 : i64, tpu.core_type = #tpu.core_type<tc>, window_params = [{transform_indices = @transform_0, window_bounds = array<i64: 1, 128, 128>}, {pipeline_mode = #tpu.pipeline_mode<synchronous>, transform_indices = @transform_1, window_bounds = array<i64: 128, 384>}, {pipeline_mode = #tpu.pipeline_mode<synchronous>, transform_indices = @transform_2, window_bounds = array<i64: 1, 384>}, {transform_indices = @transform_3, window_bounds = array<i64: 1, 128, 128>}, {transform_indices = @transform_4, window_bounds = array<i64: 1, 128, 128>}, {transform_indices = @transform_5, window_bounds = array<i64: 1, 128, 128>}]} {
    %c0 = arith.constant 0 : index
    %c0_0 = arith.constant 0 : index
    %c0_1 = arith.constant 0 : index
    %0 = vector.load %arg2[%c0, %c0_0, %c0_1] : memref<1x128x128xf32, #tpu.memory_space<vmem>>, vector<1x128x128xf32>
    %1 = vector.shape_cast %0 : vector<1x128x128xf32> to vector<128x128xf32>
    %2 = arith.truncf %1 : vector<128x128xf32> to vector<128x128xbf16>
    %c0_2 = arith.constant 0 : index
    %c0_3 = arith.constant 0 : index
    %3 = vector.load %arg3[%c0_2, %c0_3] : memref<128x384xbf16, #tpu.memory_space<vmem>>, vector<128x384xbf16>
    %cst = arith.constant dense<0.000000e+00> : vector<128x384xf32>
    %4 = tpu.matmul %2, %3, %cst {dimension_numbers = #tpu.dot_dimension_numbers<[1], [0], [0], [1], [0, 0, 1, 1], [], []>} : vector<128x128xbf16>, vector<128x384xbf16>, vector<128x384xf32> -> vector<128x384xf32>
    %c0_4 = arith.constant 0 : index
    %c0_5 = arith.constant 0 : index
    %5 = vector.load %arg4[%c0_4, %c0_5] : memref<1x384xf32, #tpu.memory_space<vmem>>, vector<1x384xf32>
    %6 = vector.broadcast %5 : vector<1x384xf32> to vector<128x384xf32>
    %7 = arith.addf %4, %6 : vector<128x384xf32>
    %cst_6 = arith.constant 0.000000e+00 : f32
    %8 = vector.broadcast %cst_6 : f32 to vector<128x384xf32>
    %9 = arith.maximumf %7, %8 : vector<128x384xf32>
    %10 = arith.truncf %9 : vector<128x384xf32> to vector<128x384xbf16>
    %11 = vector.extract_strided_slice %10 {offsets = [0, 0], sizes = [128, 128], strides = [1, 1]} : vector<128x384xbf16> to vector<128x128xbf16>
    %c0_7 = arith.constant 0 : index
    %c0_8 = arith.constant 0 : index
    %c0_9 = arith.constant 0 : index
    %12 = vector.load %arg5[%c0_7, %c0_8, %c0_9] : memref<1x128x128xbf16, #tpu.memory_space<vmem>>, vector<1x128x128xbf16>
    %13 = vector.shape_cast %12 : vector<1x128x128xbf16> to vector<128x128xbf16>
    %14 = vector.shape_cast %11 : vector<128x128xbf16> to vector<1x128x128xbf16>
    tpu.vector_store %arg5[%c0_7, %c0_8, %c0_9], %14 {strides = array<i32>} : memref<1x128x128xbf16, #tpu.memory_space<vmem>>, vector<1x128x128xbf16>,
    %15 = vector.extract_strided_slice %10 {offsets = [0, 128], sizes = [128, 128], strides = [1, 1]} : vector<128x384xbf16> to vector<128x128xbf16>
    %c0_10 = arith.constant 0 : index
    %c0_11 = arith.constant 0 : index
    %c0_12 = arith.constant 0 : index
    %16 = vector.load %arg6[%c0_10, %c0_11, %c0_12] : memref<1x128x128xbf16, #tpu.memory_space<vmem>>, vector<1x128x128xbf16>
    %17 = vector.shape_cast %16 : vector<1x128x128xbf16> to vector<128x128xbf16>
    %18 = vector.shape_cast %15 : vector<128x128xbf16> to vector<1x128x128xbf16>
    tpu.vector_store %arg6[%c0_10, %c0_11, %c0_12], %18 {strides = array<i32>} : memref<1x128x128xbf16, #tpu.memory_space<vmem>>, vector<1x128x128xbf16>,
    %19 = vector.extract_strided_slice %10 {offsets = [0, 256], sizes = [128, 128], strides = [1, 1]} : vector<128x384xbf16> to vector<128x128xbf16>
    %c0_13 = arith.constant 0 : index
    %c0_14 = arith.constant 0 : index
    %c0_15 = arith.constant 0 : index
    %20 = vector.load %arg7[%c0_13, %c0_14, %c0_15] : memref<1x128x128xbf16, #tpu.memory_space<vmem>>, vector<1x128x128xbf16>
    %21 = vector.shape_cast %20 : vector<1x128x128xbf16> to vector<128x128xbf16>
    %22 = vector.shape_cast %19 : vector<128x128xbf16> to vector<1x128x128xbf16>
    tpu.vector_store %arg7[%c0_13, %c0_14, %c0_15], %22 {strides = array<i32>} : memref<1x128x128xbf16, #tpu.memory_space<vmem>>, vector<1x128x128xbf16>,
    return
  }
  func.func @transform_0(%arg0: i32, %arg1: i32) -> (i32, i32, i32) {
    %c0_i32 = arith.constant 0 : i32
    %c0_i32_0 = arith.constant 0 : i32
    return %arg0, %arg1, %c0_i32 : i32, i32, i32
  }
  func.func @transform_1(%arg0: i32, %arg1: i32) -> (i32, i32) {
    %c0_i32 = arith.constant 0 : i32
    %c0_i32_0 = arith.constant 0 : i32
    %c0_i32_1 = arith.constant 0 : i32
    return %c0_i32, %c0_i32_0 : i32, i32
  }
  func.func @transform_2(%arg0: i32, %arg1: i32) -> (i32, i32) {
    %c0_i32 = arith.constant 0 : i32
    %c0_i32_0 = arith.constant 0 : i32
    %c0_i32_1 = arith.constant 0 : i32
    return %c0_i32, %c0_i32_0 : i32, i32
  }
  func.func @transform_3(%arg0: i32, %arg1: i32) -> (i32, i32, i32) {
    %c0_i32 = arith.constant 0 : i32
    %c0_i32_0 = arith.constant 0 : i32
    return %arg0, %arg1, %c0_i32 : i32, i32, i32
  }
  func.func @transform_4(%arg0: i32, %arg1: i32) -> (i32, i32, i32) {
    %c0_i32 = arith.constant 0 : i32
    %c0_i32_0 = arith.constant 0 : i32
    return %arg0, %arg1, %c0_i32 : i32, i32, i32
  }
  func.func @transform_5(%arg0: i32, %arg1: i32) -> (i32, i32, i32) {
    %c0_i32 = arith.constant 0 : i32
    %c0_i32_0 = arith.constant 0 : i32
    return %arg0, %arg1, %c0_i32 : i32, i32, i32
  }
}

</mosaic_0001>

<llo_original>
// kernel: tpu_custom_call.1
$region0: #{tpu_custom_call.1}
  #allocation0 [shape = 'u32[]', space=smem, size = 0x4, offset = 0x4, fixed_abs, tag = 'smem constant byte address 0x4 - core index']
  #allocation1 [shape = 'u32[144,128]{1,0:T(1,128)}', space=vmem, size = 0x12000, scoped, tag = 'internal scratch']
  %s0 = inlined_call_operand.hbm [shape: f32[2,128,128], index: 0, kind: input, shape index: {}]
  %s1 = inlined_call_operand.hbm [shape: bf16[128,384], index: 1, kind: input, shape index: {}]
  %s2 = inlined_call_operand.vmem [shape: f32[1,384], index: 2, kind: input, shape index: {}]
  %s3 = inlined_call_operand.hbm [shape: bf16[2,128,128], index: 3, kind: output, shape index: {0}]
  %s4 = inlined_call_operand.hbm [shape: bf16[2,128,128], index: 4, kind: output, shape index: {1}]
  %s5 = inlined_call_operand.hbm [shape: bf16[2,128,128], index: 5, kind: output, shape index: {2}]
  %6 = xla_tuple %s3, %s4, %s5
  %s7 = sld [smem:[#allocation0]]
  $region69: #{tpu_custom_call.1} parent=0
    _
  %s9 = ssub.s32 1, %s7
  %s10 = scalar_select 0, %s9, %s7
  $region1: #{tpu_custom_call.1} parent=0
    #allocation2 [shape = 'u8[131072]{0}', space=vmem, size = 0x20000, scoped, tag = 'input window, operand 0']
    #allocation3 [shape = 's32[2]{0}', space=sflag, size = 0x8, scoped, tag = 'scoped memory for tpu_custom_call.1']
    #allocation4 [shape = 's32[2]{0}', space=sflag, size = 0x8, scoped, tag = 'scoped memory for tpu_custom_call.1']
    #allocation5 [shape = 'u8[98304]{0}', space=vmem, size = 0x18000, scoped, tag = 'input window, operand 1, single buffered']
    #allocation6 [shape = 's32[1]{0}', space=sflag, size = 0x4, scoped, tag = 'scoped memory for tpu_custom_call.1']
    #allocation7 [shape = 'u8[65536]{0}', space=vmem, size = 0x10000, scoped, tag = 'output window, operand 0']
    #allocation8 [shape = 'u8[65536]{0}', space=vmem, size = 0x10000, scoped, tag = 'output window, operand 1']
    #allocation9 [shape = 's32[2]{0}', space=sflag, size = 0x8, scoped, tag = 'scoped memory for tpu_custom_call.1']
    #allocation10 [shape = 'u8[65536]{0}', space=vmem, size = 0x10000, scoped, tag = 'output window, operand 2']
    %11 = vsyncpa [#allocation3], 0
    %s12 = scalar_lea.sflag [#allocation3], 1
    %13 = vsyncpa %s12, 0
    %14 = vsyncpa [#allocation6], 0
    %15 = vsyncpa [#allocation4], 0
    %s16 = scalar_lea.sflag [#allocation4], 1
    %17 = vsyncpa %s16, 0
    %18 = vsyncpa [#allocation9], 0
    %s19 = scalar_lea.sflag [#allocation9], 1
    %20 = vsyncpa %s19, 0
    loop: start=0, step=1, limit=4
    $region2: #{tpu_custom_call.1} parent=1 // loop_pre_header
      _
    $region3: #{tpu_custom_call.1} parent=1 // loop_header
      %s22 = sphi 0, %s26
      %p23 = scmp.ge.s32.totalorder %s22, 4
      %s29 = sphi 0, %s41
      %s30 = sphi 0, %s37
      %s31 = sphi 0, %s29
      %s32 = sphi 0, %s30
      %s33 = sphi 0, %s31
      %s34 = sphi 0, %s32
      %s46 = sphi 0, %s48
      %s49 = sphi 0, %s46
      %s50 = sphi 0, %s49
      %s66 = sphi 0, %s50
      %s70 = sphi 0, %s70
      %s72 = sphi 0, %s70
      %s73 = sphi 0, %s72
      %s87 = sphi 0, %s73
      %s91 = sphi 0, %s91
      %s93 = sphi 0, %s91
      %s94 = sphi 0, %s93
      %s108 = sphi 0, %s94
      %s116 = sphi 0, %s118
      %s119 = sphi 0, %s116
      %s120 = sphi 0, %s119
      %s136 = sphi 0, %s120
      %s144 = sphi 0, %s146
      %s147 = sphi 0, %s144
      %s148 = sphi 0, %s147
      %s164 = sphi 0, %s148
      %s172 = sphi 0, %s174
      %s175 = sphi 0, %s172
      %s176 = sphi 0, %s175
      %s192 = sphi 0, %s176
    $region4: #{tpu_custom_call.1} parent=1 // loop_header_branch
      %25 = sbr.rel (%p23) target = $region8
    $region5: #{tpu_custom_call.1} parent=1 // loop_body
      %s27 = ssub.s32 %s22, 1
      %s28 = ssub.s32 %s22, 2
      %s35 = sadd.s32 1, %s30
      %p36 = scmp.ge.s32.totalorder %s35, 1
      %s37 = scalar_select %p36, 0, %s35
      %s38 = sadd.s32 1, %s29
      %s39 = scalar_select %p36, %s38, %s29
      %p40 = scmp.ge.s32.totalorder %s39, 2
      %s41 = scalar_select %p40, 0, %s39
      %s42 = ssub.s32 %s29, %s41
      %s43 = ssub.s32 %s30, %s37
      %s44 = sor.u32 %s42, %s43
      %p45 = scmp.eq.s32.totalorder %s44, 0
      %s47 = sadd.s32 %s46, 1
      %s48 = scalar_select %p45, %s46, %s47
      %p51 = pneg %p45
      %p52 = scmp.eq.s32.totalorder %s22, 1
      %p53 = por %p51, %p52
      %p54 = scmp.ne.s32.totalorder %s46, %s49
      %p55 = scmp.eq.s32.totalorder %s22, 0
      %p56 = por %p54, %p55
      %p57 = scmp.ne.s32.totalorder %s46, %s49
      %p58 = scmp.eq.s32.totalorder %s27, 1
      %p59 = por %p57, %p58
      %p60 = scmp.ne.s32.totalorder %s49, %s50
      %p61 = scmp.eq.s32.totalorder %s27, 0
      %p62 = por %p60, %p61
      %p63 = scmp.ne.s32.totalorder %s49, %s50
      %p64 = scmp.eq.s32.totalorder %s28, 1
      %p65 = por %p63, %p64
      %p67 = scmp.ne.s32.totalorder %s50, %s66
      %p68 = scmp.eq.s32.totalorder %s28, 0
      %p69 = por %p67, %p68
      %s71 = sadd.s32 %s70, 1
      %p74 = scmp.eq.s32.totalorder %s22, 1
      %p75 = scmp.ne.s32.totalorder %s70, %s72
      %p76 = scmp.eq.s32.totalorder %s22, 0
      %p77 = por %p75, %p76
      %p78 = scmp.ne.s32.totalorder %s70, %s72
      %p79 = scmp.eq.s32.totalorder %s27, 1
      %p80 = por %p78, %p79
      %p81 = scmp.ne.s32.totalorder %s72, %s73
      %p82 = scmp.eq.s32.totalorder %s27, 0
      %p83 = por %p81, %p82
      %p84 = scmp.ne.s32.totalorder %s72, %s73
      %p85 = scmp.eq.s32.totalorder %s28, 1
      %p86 = por %p84, %p85
      %p88 = scmp.ne.s32.totalorder %s73, %s87
      %p89 = scmp.eq.s32.totalorder %s28, 0
      %p90 = por %p88, %p89
      %s92 = sadd.s32 %s91, 1
      %p95 = scmp.eq.s32.totalorder %s22, 1
      %p96 = scmp.ne.s32.totalorder %s91, %s93
      %p97 = scmp.eq.s32.totalorder %s22, 0
      %p98 = por %p96, %p97
      %p99 = scmp.ne.s32.totalorder %s91, %s93
      %p100 = scmp.eq.s32.totalorder %s27, 1
      %p101 = por %p99, %p100
      %p102 = scmp.ne.s32.totalorder %s93, %s94
      %p103 = scmp.eq.s32.totalorder %s27, 0
      %p104 = por %p102, %p103
      %p105 = scmp.ne.s32.totalorder %s93, %s94
      %p106 = scmp.eq.s32.totalorder %s28, 1
      %p107 = por %p105, %p106
      %p109 = scmp.ne.s32.totalorder %s94, %s108
      %p110 = scmp.eq.s32.totalorder %s28, 0
      %p111 = por %p109, %p110
      %s112 = ssub.s32 %s29, %s41
      %s113 = ssub.s32 %s30, %s37
      %s114 = sor.u32 %s112, %s113
      %p115 = scmp.eq.s32.totalorder %s114, 0
      %s117 = sadd.s32 %s116, 1
      %s118 = scalar_select %p115, %s116, %s117
      %p121 = pneg %p115
      %p122 = scmp.eq.s32.totalorder %s22, 1
      %p123 = por %p121, %p122
      %p124 = scmp.ne.s32.totalorder %s116, %s119
      %p125 = scmp.eq.s32.totalorder %s22, 0
      %p126 = por %p124, %p125
      %p127 = scmp.ne.s32.totalorder %s116, %s119
      %p128 = scmp.eq.s32.totalorder %s27, 1
      %p129 = por %p127, %p128
      %p130 = scmp.ne.s32.totalorder %s119, %s120
      %p131 = scmp.eq.s32.totalorder %s27, 0
      %p132 = por %p130, %p131
      %p133 = scmp.ne.s32.totalorder %s119, %s120
      %p134 = scmp.eq.s32.totalorder %s28, 1
      %p135 = por %p133, %p134
      %p137 = scmp.ne.s32.totalorder %s120, %s136
      %p138 = scmp.eq.s32.totalorder %s28, 0
      %p139 = por %p137, %p138
      %s140 = ssub.s32 %s29, %s41
      %s141 = ssub.s32 %s30, %s37
      %s142 = sor.u32 %s140, %s141
      %p143 = scmp.eq.s32.totalorder %s142, 0
      %s145 = sadd.s32 %s144, 1
      %s146 = scalar_select %p143, %s144, %s145
      %p149 = pneg %p143
      %p150 = scmp.eq.s32.totalorder %s22, 1
      %p151 = por %p149, %p150
      %p152 = scmp.ne.s32.totalorder %s144, %s147
      %p153 = scmp.eq.s32.totalorder %s22, 0
      %p154 = por %p152, %p153
      %p155 = scmp.ne.s32.totalorder %s144, %s147
      %p156 = scmp.eq.s32.totalorder %s27, 1
      %p157 = por %p155, %p156
      %p158 = scmp.ne.s32.totalorder %s147, %s148
      %p159 = scmp.eq.s32.totalorder %s27, 0
      %p160 = por %p158, %p159
      %p161 = scmp.ne.s32.totalorder %s147, %s148
      %p162 = scmp.eq.s32.totalorder %s28, 1
      %p163 = por %p161, %p162
      %p165 = scmp.ne.s32.totalorder %s148, %s164
      %p166 = scmp.eq.s32.totalorder %s28, 0
      %p167 = por %p165, %p166
      %s168 = ssub.s32 %s29, %s41
      %s169 = ssub.s32 %s30, %s37
      %s170 = sor.u32 %s168, %s169
      %p171 = scmp.eq.s32.totalorder %s170, 0
      %s173 = sadd.s32 %s172, 1
      %s174 = scalar_select %p171, %s172, %s173
      %p177 = pneg %p171
      %p178 = scmp.eq.s32.totalorder %s22, 1
      %p179 = por %p177, %p178
      %p180 = scmp.ne.s32.totalorder %s172, %s175
      %p181 = scmp.eq.s32.totalorder %s22, 0
      %p182 = por %p180, %p181
      %p183 = scmp.ne.s32.totalorder %s172, %s175
      %p184 = scmp.eq.s32.totalorder %s27, 1
      %p185 = por %p183, %p184
      %p186 = scmp.ne.s32.totalorder %s175, %s176
      %p187 = scmp.eq.s32.totalorder %s27, 0
      %p188 = por %p186, %p187
      %p189 = scmp.ne.s32.totalorder %s175, %s176
      %p190 = scmp.eq.s32.totalorder %s28, 1
      %p191 = por %p189, %p190
      %p193 = scmp.ne.s32.totalorder %s176, %s192
      %p194 = scmp.eq.s32.totalorder %s28, 0
      %p195 = por %p193, %p194
      %p196 = scmp.le.s32.totalorder 1, %s22
      %p197 = scmp.lt.s32.totalorder %s22, 3
      %p198 = pnand %p196, %p197
      %p199 = pneg %p198
      // Predicated region
      $region9: #{tpu_custom_call.1} parent=5 // pred_check
        _
      $region10: #{tpu_custom_call.1} parent=5 // pred_check_branch
        %201 = sbr.rel (%p198) target = $region12
      $region11: #{tpu_custom_call.1} parent=5 // pred_region
        %s202 = ssub.s32 %s22, 1
        // Predicated region
        $region13: #{tpu_custom_call.1} parent=11 // pred_check
          %p203 = pneg %p83
        $region14: #{tpu_custom_call.1} parent=11 // pred_check_branch
          %205 = sbr.rel (%p203) target = $region16
        $region15: #{tpu_custom_call.1} parent=11 // pred_region
          %s207 = ssub.s32 3072, 3072
          %208 = vsyncadd [#allocation6], %s207
          %s209 = sshll.u32 [#allocation5], 4
          %s210 = int_to_ptr.vmem [resolvable:$true] %s209
          %215 = dma.hbm_to_vmem [thread:$0]  %s1, 3072, %s210, [#allocation6], 192, 192, 12
        $region16: #{tpu_custom_call.1} parent=11 // pred_fallthru
          _
        // Predicated region
        $region17: #{tpu_custom_call.1} parent=11 // pred_check
          %p216 = pneg %p104
        $region18: #{tpu_custom_call.1} parent=11 // pred_check_branch
          %218 = sbr.rel (%p216) target = $region20
        $region19: #{tpu_custom_call.1} parent=11 // pred_region
          _
        $region20: #{tpu_custom_call.1} parent=11 // pred_fallthru
          _
      $region12: #{tpu_custom_call.1} parent=5 // pred_fallthru
        _
      %p219 = scmp.lt.s32.totalorder %s22, 2
      // Predicated region
      $region21: #{tpu_custom_call.1} parent=5 // pred_check
        %p220 = pneg %p219
      $region22: #{tpu_custom_call.1} parent=5 // pred_check_branch
        %222 = sbr.rel (%p220) target = $region24
      $region23: #{tpu_custom_call.1} parent=5 // pred_region
        // Predicated region
        $region25: #{tpu_custom_call.1} parent=23 // pred_check
          %p223 = pneg %p56
        $region26: #{tpu_custom_call.1} parent=23 // pred_check_branch
          %225 = sbr.rel (%p223) target = $region28
        $region27: #{tpu_custom_call.1} parent=23 // pred_region
          %s226 = sand.u32 %s46, 1
          %s227 = scalar_lea.sflag [#allocation3], %s226
          %s228 = sand.u32 %s46, 1
          %s229 = smul.addr %s228, 128
          %s230 = scalar_lea.vmem [#allocation2], %s229
          %s231 = smul.u32 16, %s30
          %s233 = ssub.s32 2048, 2048
          %234 = vsyncadd %s227, %s233
          %s235 = smul.addr %s29, 16
          %s236 = sadd.s32 %s231, %s235
          %s237 = smul.addr %s236, 128
          %s238 = scalar_lea.hbm %s0, %s237
          %s239 = sshll.u32 %s230, 4
          %s240 = int_to_ptr.vmem [resolvable:$true] %s239
          %245 = dma.hbm_to_vmem [thread:$0]  %s238, 2048, %s240, %s227, 128, 128, 8
        $region28: #{tpu_custom_call.1} parent=23 // pred_fallthru
          _
      $region24: #{tpu_custom_call.1} parent=5 // pred_fallthru
        _
      %p246 = scmp.le.s32.totalorder 1, %s22
      %p247 = scmp.lt.s32.totalorder %s22, 3
      %p248 = pnand %p246, %p247
      %p249 = pneg %p248
      // Predicated region
      $region29: #{tpu_custom_call.1} parent=5 // pred_check
        _
      $region30: #{tpu_custom_call.1} parent=5 // pred_check_branch
        %251 = sbr.rel (%p248) target = $region32
      $region31: #{tpu_custom_call.1} parent=5 // pred_region
        %s252 = ssub.s32 %s22, 1
        %s253 = sand.u32 %s49, 1
        %s254 = scalar_lea.sflag [#allocation3], %s253
        %s255 = sand.u32 %s49, 1
        %s256 = smul.addr %s255, 128
        %s257 = scalar_lea.vmem [#allocation2], %s256
        // Predicated region
        $region33: #{tpu_custom_call.1} parent=31 // pred_check
          %p258 = pneg %p62
        $region34: #{tpu_custom_call.1} parent=31 // pred_check_branch
          %260 = sbr.rel (%p258) target = $region36
        $region35: #{tpu_custom_call.1} parent=31 // pred_region
          %261 = dma.done %s254, 2048
        $region36: #{tpu_custom_call.1} parent=31 // pred_fallthru
          _
        // Predicated region
        $region37: #{tpu_custom_call.1} parent=31 // pred_check
          %p262 = pneg %p83
        $region38: #{tpu_custom_call.1} parent=31 // pred_check_branch
          %264 = sbr.rel (%p262) target = $region40
        $region39: #{tpu_custom_call.1} parent=31 // pred_region
          %265 = dma.done [#allocation6], 3072
        $region40: #{tpu_custom_call.1} parent=31 // pred_fallthru
          _
        %s266 = sand.u32 %s49, 1
        %s267 = scalar_lea.sflag [#allocation3], %s266
        %s268 = sand.u32 %s49, 1
        %s269 = smul.addr %s268, 128
        %s270 = scalar_lea.vmem [#allocation2], %s269
        %p271 = pneg %p62
        %p272 = pneg %p59
        %p273 = pneg %p83
        %p274 = pneg %p80
        %p275 = pneg %p104
        %p276 = pneg %p101
        %p277 = pneg %p132
        %p278 = pneg %p129
        %s279 = sand.u32 %s119, 1
        %s280 = scalar_lea.sflag [#allocation4], %s279
        %s281 = sand.u32 %s119, 1
        %s282 = smul.addr %s281, 64
        %s283 = scalar_lea.vmem [#allocation7], %s282
        %p284 = pneg %p160
        %p285 = pneg %p157
        %s286 = sand.u32 %s27, 1
        %s287 = scalar_lea.sflag [#allocation9], %s286
        %s288 = sand.u32 %s147, 1
        %s289 = smul.addr %s288, 64
        %s290 = scalar_lea.vmem [#allocation8], %s289
        %p291 = pneg %p188
        %p292 = pneg %p185
        %s293 = sand.u32 %s27, 1
        %s294 = scalar_lea.sflag [#allocation9], %s293
        %s295 = sand.u32 %s175, 1
        %s296 = smul.addr %s295, 64
        %s297 = scalar_lea.vmem [#allocation10], %s296
        %s298 = smul.u32 16, %s32
        %s299 = smul.u32 16, %s32
        %s300 = smul.u32 16, %s32
        %s301 = smul.u32 16, %s32
        %v303 = vld [vmem:[%s257] sm:$0xff]
        %v304 = vld [vmem:[%s257 + $0x8] sm:$0xff]
        %v305 = vld [vmem:[%s257 + $0x10] sm:$0xff]
        %v306 = vld [vmem:[%s257 + $0x18] sm:$0xff]
        %v307 = vld [vmem:[%s257 + $0x20] sm:$0xff]
        %v308 = vld [vmem:[%s257 + $0x28] sm:$0xff]
        %v309 = vld [vmem:[%s257 + $0x30] sm:$0xff]
        %v310 = vld [vmem:[%s257 + $0x38] sm:$0xff]
        %v311 = vld [vmem:[%s257 + $0x40] sm:$0xff]
        %v312 = vld [vmem:[%s257 + $0x48] sm:$0xff]
        %v313 = vld [vmem:[%s257 + $0x50] sm:$0xff]
        %v314 = vld [vmem:[%s257 + $0x58] sm:$0xff]
        %v315 = vld [vmem:[%s257 + $0x60] sm:$0xff]
        %v316 = vld [vmem:[%s257 + $0x68] sm:$0xff]
        %v317 = vld [vmem:[%s257 + $0x70] sm:$0xff]
        %v318 = vld [vmem:[%s257 + $0x78] sm:$0xff]
        %v319 = vpack.c.bf16 %v304, %v303
        %v320 = vpack.c.bf16 %v306, %v305
        %v321 = vpack.c.bf16 %v308, %v307
        %v322 = vpack.c.bf16 %v310, %v309
        %v323 = vpack.c.bf16 %v312, %v311
        %v324 = vpack.c.bf16 %v314, %v313
        %v325 = vpack.c.bf16 %v316, %v315
        %v326 = vpack.c.bf16 %v318, %v317
        %v327 = vld [vmem:[#allocation5] sm:$0xff]
        %v328 = vld [vmem:[#allocation5 + $0x8] sm:$0xf]
        %v329 = vld [vmem:[#allocation5 + $0xc] sm:$0xff]
        %v330 = vld [vmem:[#allocation5 + $0x14] sm:$0xf]
        %v331 = vld [vmem:[#allocation5 + $0x18] sm:$0xff]
        %v332 = vld [vmem:[#allocation5 + $0x20] sm:$0xf]
        %v333 = vld [vmem:[#allocation5 + $0x24] sm:$0xff]
        %v334 = vld [vmem:[#allocation5 + $0x2c] sm:$0xf]
        %v335 = vld [vmem:[#allocation5 + $0x30] sm:$0xff]
        %v336 = vld [vmem:[#allocation5 + $0x38] sm:$0xf]
        %v337 = vld [vmem:[#allocation5 + $0x3c] sm:$0xff]
        %v338 = vld [vmem:[#allocation5 + $0x44] sm:$0xf]
        %v339 = vld [vmem:[#allocation5 + $0x48] sm:$0xff]
        %v340 = vld [vmem:[#allocation5 + $0x50] sm:$0xf]
        %v341 = vld [vmem:[#allocation5 + $0x54] sm:$0xff]
        %v342 = vld [vmem:[#allocation5 + $0x5c] sm:$0xf]
        %v343 = vld [vmem:[#allocation5 + $0x60] sm:$0xff]
        %v344 = vld [vmem:[#allocation5 + $0x68] sm:$0xf]
        %v345 = vld [vmem:[#allocation5 + $0x6c] sm:$0xff]
        %v346 = vld [vmem:[#allocation5 + $0x74] sm:$0xf]
        %v347 = vld [vmem:[#allocation5 + $0x78] sm:$0xff]
        %v348 = vld [vmem:[#allocation5 + $0x80] sm:$0xf]
        %v349 = vld [vmem:[#allocation5 + $0x84] sm:$0xff]
        %v350 = vld [vmem:[#allocation5 + $0x8c] sm:$0xf]
        %v351 = vld [vmem:[#allocation5 + $0x90] sm:$0xff]
        %v352 = vld [vmem:[#allocation5 + $0x98] sm:$0xf]
        %v353 = vld [vmem:[#allocation5 + $0x9c] sm:$0xff]
        %v354 = vld [vmem:[#allocation5 + $0xa4] sm:$0xf]
        %v355 = vld [vmem:[#allocation5 + $0xa8] sm:$0xff]
        %v356 = vld [vmem:[#allocation5 + $0xb0] sm:$0xf]
        %v357 = vld [vmem:[#allocation5 + $0xb4] sm:$0xff]
        %v358 = vld [vmem:[#allocation5 + $0xbc] sm:$0xf]
        %v359 = vld [vmem:[%s2] sm:$0x7]
        %v361 = vlaneseq
        %v362 = vshrl.u32 %v361, 7
        %v363 = vsub.s32 0, %v362
        %v364 = vrot.slane %v359, %v363
        %v365 = vlaneseq
        %v366 = vshrl.u32 %v365, 7
        %v367 = vsub.s32 1, %v366
        %v368 = vrot.slane %v359, %v367
        %v369 = vlaneseq
        %v370 = vshrl.u32 %v369, 7
        %v371 = vsub.s32 2, %v370
        %v372 = vrot.slane %v359, %v371
        %v408 = vunpack.c.l.b16 %v327
        %v409 = vunpack.c.h.b16 %v327
        %v410 = vunpack.c.l.b16 %v328
        %v411 = vunpack.c.l.b16 %v329
        %v412 = vunpack.c.h.b16 %v329
        %v413 = vunpack.c.l.b16 %v330
        %v414 = vunpack.c.l.b16 %v331
        %v415 = vunpack.c.h.b16 %v331
        %v416 = vunpack.c.l.b16 %v332
        %v417 = vunpack.c.l.b16 %v333
        %v418 = vunpack.c.h.b16 %v333
        %v419 = vunpack.c.l.b16 %v334
        %v420 = vunpack.c.l.b16 %v335
        %v421 = vunpack.c.h.b16 %v335
        %v422 = vunpack.c.l.b16 %v336
        %v423 = vunpack.c.l.b16 %v337
        %v424 = vunpack.c.h.b16 %v337
        %v425 = vunpack.c.l.b16 %v338
        %v426 = vunpack.c.l.b16 %v339
        %v427 = vunpack.c.h.b16 %v339
        %v428 = vunpack.c.l.b16 %v340
        %v429 = vunpack.c.l.b16 %v341
        %v430 = vunpack.c.h.b16 %v341
        %v431 = vunpack.c.l.b16 %v342
        %v432 = vunpack.c.l.b16 %v343
        %v433 = vunpack.c.h.b16 %v343
        %v434 = vunpack.c.l.b16 %v344
        %v435 = vunpack.c.l.b16 %v345
        %v436 = vunpack.c.h.b16 %v345
        %v437 = vunpack.c.l.b16 %v346
        %v438 = vunpack.c.l.b16 %v347
        %v439 = vunpack.c.h.b16 %v347
        %v440 = vunpack.c.l.b16 %v348
        %v441 = vunpack.c.l.b16 %v349
        %v442 = vunpack.c.h.b16 %v349
        %v443 = vunpack.c.l.b16 %v350
        %v444 = vunpack.c.l.b16 %v351
        %v445 = vunpack.c.h.b16 %v351
        %v446 = vunpack.c.l.b16 %v352
        %v447 = vunpack.c.l.b16 %v353
        %v448 = vunpack.c.h.b16 %v353
        %v449 = vunpack.c.l.b16 %v354
        %v450 = vunpack.c.l.b16 %v355
        %v451 = vunpack.c.h.b16 %v355
        %v452 = vunpack.c.l.b16 %v356
        %v453 = vunpack.c.l.b16 %v357
        %v454 = vunpack.c.h.b16 %v357
        %v455 = vunpack.c.l.b16 %v358
        %v456 = vpack.c.b16 %v411, %v408
        %v457 = vpack.c.b16 %v412, %v409
        %v458 = vpack.c.b16 %v413, %v410
        %v459 = vpack.c.b16 %v417, %v414
        %v460 = vpack.c.b16 %v418, %v415
        %v461 = vpack.c.b16 %v419, %v416
        %v462 = vpack.c.b16 %v423, %v420
        %v463 = vpack.c.b16 %v424, %v421
        %v464 = vpack.c.b16 %v425, %v422
        %v465 = vpack.c.b16 %v429, %v426
        %v466 = vpack.c.b16 %v430, %v427
        %v467 = vpack.c.b16 %v431, %v428
        %v468 = vpack.c.b16 %v435, %v432
        %v469 = vpack.c.b16 %v436, %v433
        %v470 = vpack.c.b16 %v437, %v434
        %v471 = vpack.c.b16 %v441, %v438
        %v472 = vpack.c.b16 %v442, %v439
        %v473 = vpack.c.b16 %v443, %v440
        %v474 = vpack.c.b16 %v447, %v444
        %v475 = vpack.c.b16 %v448, %v445
        %v476 = vpack.c.b16 %v449, %v446
        %v477 = vpack.c.b16 %v453, %v450
        %v478 = vpack.c.b16 %v454, %v451
        %v479 = vpack.c.b16 %v455, %v452
        %504 = vmatprep.subr.bf16.mxu0 %v478
        %505 = vmatpush1.bf16.msra.mxu0 %v477
        %506 = vmatprep.subr.bf16.mxu0 %v475
        %507 = vmatpush1.bf16.msra.mxu0 %v474
        %508 = vmatprep.subr.bf16.mxu0 %v472
        %509 = vmatpush1.bf16.msra.mxu0 %v471
        %510 = vmatprep.subr.bf16.mxu0 %v469
        %511 = vmatpush1.bf16.msra.mxu0 %v468
        %512 = vmatprep.subr.bf16.mxu0 %v466
        %513 = vmatpush1.bf16.msra.mxu0 %v465
        %514 = vmatprep.subr.bf16.mxu0 %v463
        %515 = vmatpush1.bf16.msra.mxu0 %v462
        %516 = vmatprep.subr.bf16.mxu0 %v460
        %517 = vmatpush1.bf16.msra.mxu0 %v459
        %518 = vmatprep.subr.bf16.mxu0 %v457
        %519 = vmatpush1.bf16.msra.mxu0 %v456
        %520 = vmatprep.subr.bf16.mxu0 0
        %521 = vmatpush2.bf16.msra.mxu0 0
        %522 = vmatprep.subr.bf16.mxu0 0
        %523 = vmatpush2.bf16.msra.mxu0 0
        %524 = vmatprep.subr.bf16.mxu0 0
        %525 = vmatpush2.bf16.msra.mxu0 0
        %526 = vmatprep.subr.bf16.mxu0 0
        %527 = vmatpush2.bf16.msra.mxu0 0
        %528 = vmatprep.subr.bf16.mxu0 0
        %529 = vmatpush2.bf16.msra.mxu0 0
        %530 = vmatprep.subr.bf16.mxu0 0
        %531 = vmatpush2.bf16.msra.mxu0 0
        %532 = vmatprep.subr.bf16.mxu0 0
        %533 = vmatpush2.bf16.msra.mxu0 0
        %534 = vmatprep.subr.bf16.mxu0 0
        %535 = vmatpush2.bf16.msra.mxu0 0
        %536 = vmatprep.mubr.bf16.mxu0 0
        %537 = vmatmul.mubr.bf16.gmra.mxu0 %v319
        %v538 = vpop.f32.mrf.mxu0
        %v539 = vadd.f32 %v364, %v538
        %v540 = vpop.f32.mrf.mxu0
        %v541 = vadd.f32 %v368, %v540
        %v542 = vpop.f32.mrf.mxu0
        %v543 = vadd.f32 %v364, %v542
        %v544 = vpop.f32.mrf.mxu0
        %v545 = vadd.f32 %v368, %v544
        %546 = vmatprep.mubr.bf16.mxu0 0
        %547 = vmatmul.mubr.bf16.gmra.mxu0 %v320
        %v548 = vpop.f32.mrf.mxu0
        %v549 = vadd.f32 %v364, %v548
        %v550 = vpop.f32.mrf.mxu0
        %v551 = vadd.f32 %v368, %v550
        %v552 = vpop.f32.mrf.mxu0
        %v553 = vadd.f32 %v364, %v552
        %v554 = vpop.f32.mrf.mxu0
        %v555 = vadd.f32 %v368, %v554
        %556 = vmatprep.mubr.bf16.mxu0 0
        %557 = vmatmul.mubr.bf16.gmra.mxu0 %v321
        %v558 = vpop.f32.mrf.mxu0
        %v559 = vadd.f32 %v364, %v558
        %v560 = vpop.f32.mrf.mxu0
        %v561 = vadd.f32 %v368, %v560
        %v562 = vpop.f32.mrf.mxu0
        %v563 = vadd.f32 %v364, %v562
        %v564 = vpop.f32.mrf.mxu0
        %v565 = vadd.f32 %v368, %v564
        %566 = vmatprep.mubr.bf16.mxu0 0
        %567 = vmatmul.mubr.bf16.gmra.mxu0 %v322
        %v568 = vpop.f32.mrf.mxu0
        %v569 = vadd.f32 %v364, %v568
        %v570 = vpop.f32.mrf.mxu0
        %v571 = vadd.f32 %v368, %v570
        %v572 = vpop.f32.mrf.mxu0
        %v573 = vadd.f32 %v364, %v572
        %v574 = vpop.f32.mrf.mxu0
        %v575 = vadd.f32 %v368, %v574
        %576 = vmatprep.mubr.bf16.mxu0 0
        %577 = vmatmul.mubr.bf16.gmra.mxu0 %v323
        %v578 = vpop.f32.mrf.mxu0
        %v579 = vadd.f32 %v364, %v578
        %v580 = vpop.f32.mrf.mxu0
        %v581 = vadd.f32 %v368, %v580
        %v582 = vpop.f32.mrf.mxu0
        %v583 = vadd.f32 %v364, %v582
        %v584 = vpop.f32.mrf.mxu0
        %v585 = vadd.f32 %v368, %v584
        %586 = vmatprep.mubr.bf16.mxu0 0
        %587 = vmatmul.mubr.bf16.gmra.mxu0 %v324
        %v588 = vpop.f32.mrf.mxu0
        %v589 = vadd.f32 %v364, %v588
        %v590 = vpop.f32.mrf.mxu0
        %v591 = vadd.f32 %v368, %v590
        %v592 = vpop.f32.mrf.mxu0
        %v593 = vadd.f32 %v364, %v592
        %v594 = vpop.f32.mrf.mxu0
        %v595 = vadd.f32 %v368, %v594
        %596 = vmatprep.mubr.bf16.mxu0 0
        %597 = vmatmul.mubr.bf16.gmra.mxu0 %v325
        %v598 = vpop.f32.mrf.mxu0
        %v599 = vadd.f32 %v364, %v598
        %v600 = vpop.f32.mrf.mxu0
        %v601 = vadd.f32 %v368, %v600
        %v602 = vpop.f32.mrf.mxu0
        %v603 = vadd.f32 %v364, %v602
        %v604 = vpop.f32.mrf.mxu0
        %v605 = vadd.f32 %v368, %v604
        %606 = vmatprep.mubr.bf16.mxu0 0
        %607 = vmatmul.mubr.bf16.gmra.mxu0 %v326
        %v608 = vpop.f32.mrf.mxu0
        %v609 = vadd.f32 %v364, %v608
        %v610 = vpop.f32.mrf.mxu0
        %v611 = vadd.f32 %v368, %v610
        %v612 = vpop.f32.mrf.mxu0
        %v613 = vadd.f32 %v364, %v612
        %v614 = vpop.f32.mrf.mxu0
        %v615 = vadd.f32 %v368, %v614
        %616 = vdwg.mxu0
        %617 = vmatprep.subr.bf16.mxu0 0
        %618 = vmatpush1.bf16.msra.mxu0 %v479
        %619 = vmatprep.subr.bf16.mxu0 0
        %620 = vmatpush1.bf16.msra.mxu0 %v476
        %621 = vmatprep.subr.bf16.mxu0 0
        %622 = vmatpush1.bf16.msra.mxu0 %v473
        %623 = vmatprep.subr.bf16.mxu0 0
        %624 = vmatpush1.bf16.msra.mxu0 %v470
        %625 = vmatprep.subr.bf16.mxu0 0
        %626 = vmatpush1.bf16.msra.mxu0 %v467
        %627 = vmatprep.subr.bf16.mxu0 0
        %628 = vmatpush1.bf16.msra.mxu0 %v464
        %629 = vmatprep.subr.bf16.mxu0 0
        %630 = vmatpush1.bf16.msra.mxu0 %v461
        %631 = vmatprep.subr.bf16.mxu0 0
        %632 = vmatpush1.bf16.msra.mxu0 %v458
        %633 = vmatprep.subr.bf16.mxu0 0
        %634 = vmatpush2.bf16.msra.mxu0 0
        %635 = vmatprep.subr.bf16.mxu0 0
        %636 = vmatpush2.bf16.msra.mxu0 0
        %637 = vmatprep.subr.bf16.mxu0 0
        %638 = vmatpush2.bf16.msra.mxu0 0
        %639 = vmatprep.subr.bf16.mxu0 0
        %640 = vmatpush2.bf16.msra.mxu0 0
        %641 = vmatprep.subr.bf16.mxu0 0
        %642 = vmatpush2.bf16.msra.mxu0 0
        %643 = vmatprep.subr.bf16.mxu0 0
        %644 = vmatpush2.bf16.msra.mxu0 0
        %645 = vmatprep.subr.bf16.mxu0 0
        %646 = vmatpush2.bf16.msra.mxu0 0
        %647 = vmatprep.subr.bf16.mxu0 0
        %648 = vmatpush2.bf16.msra.mxu0 0
        %649 = vmatprep.mubr.bf16.mxu0 0
        %650 = vmatmul.mubr.bf16.gmra.mxu0 %v319
        %v651 = vpop.f32.mrf.mxu0
        %v652 = vadd.f32 %v372, %v651
        %v653 = vpop.f32.mrf.mxu0
        %v654 = vpop.f32.mrf.mxu0
        %v655 = vadd.f32 %v372, %v654
        %v656 = vpop.f32.mrf.mxu0
        %657 = vmatprep.mubr.bf16.mxu0 0
        %658 = vmatmul.mubr.bf16.gmra.mxu0 %v320
        %v659 = vpop.f32.mrf.mxu0
        %v660 = vadd.f32 %v372, %v659
        %v661 = vpop.f32.mrf.mxu0
        %v662 = vpop.f32.mrf.mxu0
        %v663 = vadd.f32 %v372, %v662
        %v664 = vpop.f32.mrf.mxu0
        %665 = vmatprep.mubr.bf16.mxu0 0
        %666 = vmatmul.mubr.bf16.gmra.mxu0 %v321
        %v667 = vpop.f32.mrf.mxu0
        %v668 = vadd.f32 %v372, %v667
        %v669 = vpop.f32.mrf.mxu0
        %v670 = vpop.f32.mrf.mxu0
        %v671 = vadd.f32 %v372, %v670
        %v672 = vpop.f32.mrf.mxu0
        %673 = vmatprep.mubr.bf16.mxu0 0
        %674 = vmatmul.mubr.bf16.gmra.mxu0 %v322
        %v675 = vpop.f32.mrf.mxu0
        %v676 = vadd.f32 %v372, %v675
        %v677 = vpop.f32.mrf.mxu0
        %v678 = vpop.f32.mrf.mxu0
        %v679 = vadd.f32 %v372, %v678
        %v680 = vpop.f32.mrf.mxu0
        %681 = vmatprep.mubr.bf16.mxu0 0
        %682 = vmatmul.mubr.bf16.gmra.mxu0 %v323
        %v683 = vpop.f32.mrf.mxu0
        %v684 = vadd.f32 %v372, %v683
        %v685 = vpop.f32.mrf.mxu0
        %v686 = vpop.f32.mrf.mxu0
        %v687 = vadd.f32 %v372, %v686
        %v688 = vpop.f32.mrf.mxu0
        %689 = vmatprep.mubr.bf16.mxu0 0
        %690 = vmatmul.mubr.bf16.gmra.mxu0 %v324
        %v691 = vpop.f32.mrf.mxu0
        %v692 = vadd.f32 %v372, %v691
        %v693 = vpop.f32.mrf.mxu0
        %v694 = vpop.f32.mrf.mxu0
        %v695 = vadd.f32 %v372, %v694
        %v696 = vpop.f32.mrf.mxu0
        %697 = vmatprep.mubr.bf16.mxu0 0
        %698 = vmatmul.mubr.bf16.gmra.mxu0 %v325
        %v699 = vpop.f32.mrf.mxu0
        %v700 = vadd.f32 %v372, %v699
        %v701 = vpop.f32.mrf.mxu0
        %v702 = vpop.f32.mrf.mxu0
        %v703 = vadd.f32 %v372, %v702
        %v704 = vpop.f32.mrf.mxu0
        %705 = vmatprep.mubr.bf16.mxu0 0
        %706 = vmatmul.mubr.bf16.gmra.mxu0 %v326
        %v707 = vpop.f32.mrf.mxu0
        %v708 = vadd.f32 %v372, %v707
        %v709 = vpop.f32.mrf.mxu0
        %v710 = vpop.f32.mrf.mxu0
        %v711 = vadd.f32 %v372, %v710
        %v712 = vpop.f32.mrf.mxu0
        %713 = vdwg.mxu0
        %v714 = vmax.f32 %v539, 0.0
        %v715 = vmax.f32 %v541, 0.0
        %v716 = vmax.f32 %v652, 0.0
        %v717 = vmax.f32 %v543, 0.0
        %v718 = vmax.f32 %v545, 0.0
        %v719 = vmax.f32 %v655, 0.0
        %v720 = vmax.f32 %v549, 0.0
        %v721 = vmax.f32 %v551, 0.0
        %v722 = vmax.f32 %v660, 0.0
        %v723 = vmax.f32 %v553, 0.0
        %v724 = vmax.f32 %v555, 0.0
        %v725 = vmax.f32 %v663, 0.0
        %v726 = vmax.f32 %v559, 0.0
        %v727 = vmax.f32 %v561, 0.0
        %v728 = vmax.f32 %v668, 0.0
        %v729 = vmax.f32 %v563, 0.0
        %v730 = vmax.f32 %v565, 0.0
        %v731 = vmax.f32 %v671, 0.0
        %v732 = vmax.f32 %v569, 0.0
        %v733 = vmax.f32 %v571, 0.0
        %v734 = vmax.f32 %v676, 0.0
        %v735 = vmax.f32 %v573, 0.0
        %v736 = vmax.f32 %v575, 0.0
        %v737 = vmax.f32 %v679, 0.0
        %v738 = vmax.f32 %v579, 0.0
        %v739 = vmax.f32 %v581, 0.0
        %v740 = vmax.f32 %v684, 0.0
        %v741 = vmax.f32 %v583, 0.0
        %v742 = vmax.f32 %v585, 0.0
        %v743 = vmax.f32 %v687, 0.0
        %v744 = vmax.f32 %v589, 0.0
        %v745 = vmax.f32 %v591, 0.0
        %v746 = vmax.f32 %v692, 0.0
        %v747 = vmax.f32 %v593, 0.0
        %v748 = vmax.f32 %v595, 0.0
        %v749 = vmax.f32 %v695, 0.0
        %v750 = vmax.f32 %v599, 0.0
        %v751 = vmax.f32 %v601, 0.0
        %v752 = vmax.f32 %v700, 0.0
        %v753 = vmax.f32 %v603, 0.0
        %v754 = vmax.f32 %v605, 0.0
        %v755 = vmax.f32 %v703, 0.0
        %v756 = vmax.f32 %v609, 0.0
        %v757 = vmax.f32 %v611, 0.0
        %v758 = vmax.f32 %v708, 0.0
        %v759 = vmax.f32 %v613, 0.0
        %v760 = vmax.f32 %v615, 0.0
        %v761 = vmax.f32 %v711, 0.0
        %v762 = vpack.c.bf16 %v717, %v714
        %v763 = vpack.c.bf16 %v718, %v715
        %v764 = vpack.c.bf16 %v719, %v716
        %v765 = vpack.c.bf16 %v723, %v720
        %v766 = vpack.c.bf16 %v724, %v721
        %v767 = vpack.c.bf16 %v725, %v722
        %v768 = vpack.c.bf16 %v729, %v726
        %v769 = vpack.c.bf16 %v730, %v727
        %v770 = vpack.c.bf16 %v731, %v728
        %v771 = vpack.c.bf16 %v735, %v732
        %v772 = vpack.c.bf16 %v736, %v733
        %v773 = vpack.c.bf16 %v737, %v734
        %v774 = vpack.c.bf16 %v741, %v738
        %v775 = vpack.c.bf16 %v742, %v739
        %v776 = vpack.c.bf16 %v743, %v740
        %v777 = vpack.c.bf16 %v747, %v744
        %v778 = vpack.c.bf16 %v748, %v745
        %v779 = vpack.c.bf16 %v749, %v746
        %v780 = vpack.c.bf16 %v753, %v750
        %v781 = vpack.c.bf16 %v754, %v751
        %v782 = vpack.c.bf16 %v755, %v752
        %v783 = vpack.c.bf16 %v759, %v756
        %v784 = vpack.c.bf16 %v760, %v757
        %v785 = vpack.c.bf16 %v761, %v758
        %v794 = vunpack.c.l.b16 %v762
        %v795 = vunpack.c.h.b16 %v762
        %v796 = vunpack.c.l.b16 %v765
        %v797 = vunpack.c.h.b16 %v765
        %v798 = vunpack.c.l.b16 %v768
        %v799 = vunpack.c.h.b16 %v768
        %v800 = vunpack.c.l.b16 %v771
        %v801 = vunpack.c.h.b16 %v771
        %v802 = vunpack.c.l.b16 %v774
        %v803 = vunpack.c.h.b16 %v774
        %v804 = vunpack.c.l.b16 %v777
        %v805 = vunpack.c.h.b16 %v777
        %v806 = vunpack.c.l.b16 %v780
        %v807 = vunpack.c.h.b16 %v780
        %v808 = vunpack.c.l.b16 %v783
        %v809 = vunpack.c.h.b16 %v783
        %v810 = vpack.c.b16 %v794, %v794
        %v811 = vpack.c.b16 %v795, %v795
        %v812 = vpack.c.b16 %v796, %v796
        %v813 = vpack.c.b16 %v797, %v797
        %v814 = vpack.c.b16 %v798, %v798
        %v815 = vpack.c.b16 %v799, %v799
        %v816 = vpack.c.b16 %v800, %v800
        %v817 = vpack.c.b16 %v801, %v801
        %v818 = vpack.c.b16 %v802, %v802
        %v819 = vpack.c.b16 %v803, %v803
        %v820 = vpack.c.b16 %v804, %v804
        %v821 = vpack.c.b16 %v805, %v805
        %v822 = vpack.c.b16 %v806, %v806
        %v823 = vpack.c.b16 %v807, %v807
        %v824 = vpack.c.b16 %v808, %v808
        %v825 = vpack.c.b16 %v809, %v809
        %842 = vst [vmem:[%s283] sm:$0xf] %v810
        %843 = vst [vmem:[%s283 + $0x4] sm:$0xf] %v811
        %844 = vst [vmem:[%s283 + $0x8] sm:$0xf] %v812
        %845 = vst [vmem:[%s283 + $0xc] sm:$0xf] %v813
        %846 = vst [vmem:[%s283 + $0x10] sm:$0xf] %v814
        %847 = vst [vmem:[%s283 + $0x14] sm:$0xf] %v815
        %848 = vst [vmem:[%s283 + $0x18] sm:$0xf] %v816
        %849 = vst [vmem:[%s283 + $0x1c] sm:$0xf] %v817
        %850 = vst [vmem:[%s283 + $0x20] sm:$0xf] %v818
        %851 = vst [vmem:[%s283 + $0x24] sm:$0xf] %v819
        %852 = vst [vmem:[%s283 + $0x28] sm:$0xf] %v820
        %853 = vst [vmem:[%s283 + $0x2c] sm:$0xf] %v821
        %854 = vst [vmem:[%s283 + $0x30] sm:$0xf] %v822
        %855 = vst [vmem:[%s283 + $0x34] sm:$0xf] %v823
        %856 = vst [vmem:[%s283 + $0x38] sm:$0xf] %v824
        %857 = vst [vmem:[%s283 + $0x3c] sm:$0xf] %v825
        %v866 = vunpack.c.l.b16 %v763
        %v867 = vunpack.c.h.b16 %v763
        %v868 = vunpack.c.l.b16 %v766
        %v869 = vunpack.c.h.b16 %v766
        %v870 = vunpack.c.l.b16 %v769
        %v871 = vunpack.c.h.b16 %v769
        %v872 = vunpack.c.l.b16 %v772
        %v873 = vunpack.c.h.b16 %v772
        %v874 = vunpack.c.l.b16 %v775
        %v875 = vunpack.c.h.b16 %v775
        %v876 = vunpack.c.l.b16 %v778
        %v877 = vunpack.c.h.b16 %v778
        %v878 = vunpack.c.l.b16 %v781
        %v879 = vunpack.c.h.b16 %v781
        %v880 = vunpack.c.l.b16 %v784
        %v881 = vunpack.c.h.b16 %v784
        %v882 = vpack.c.b16 %v866, %v866
        %v883 = vpack.c.b16 %v867, %v867
        %v884 = vpack.c.b16 %v868, %v868
        %v885 = vpack.c.b16 %v869, %v869
        %v886 = vpack.c.b16 %v870, %v870
        %v887 = vpack.c.b16 %v871, %v871
        %v888 = vpack.c.b16 %v872, %v872
        %v889 = vpack.c.b16 %v873, %v873
        %v890 = vpack.c.b16 %v874, %v874
        %v891 = vpack.c.b16 %v875, %v875
        %v892 = vpack.c.b16 %v876, %v876
        %v893 = vpack.c.b16 %v877, %v877
        %v894 = vpack.c.b16 %v878, %v878
        %v895 = vpack.c.b16 %v879, %v879
        %v896 = vpack.c.b16 %v880, %v880
        %v897 = vpack.c.b16 %v881, %v881
        %914 = vst [vmem:[%s290] sm:$0xf] %v882
        %915 = vst [vmem:[%s290 + $0x4] sm:$0xf] %v883
        %916 = vst [vmem:[%s290 + $0x8] sm:$0xf] %v884
        %917 = vst [vmem:[%s290 + $0xc] sm:$0xf] %v885
        %918 = vst [vmem:[%s290 + $0x10] sm:$0xf] %v886
        %919 = vst [vmem:[%s290 + $0x14] sm:$0xf] %v887
        %920 = vst [vmem:[%s290 + $0x18] sm:$0xf] %v888
        %921 = vst [vmem:[%s290 + $0x1c] sm:$0xf] %v889
        %922 = vst [vmem:[%s290 + $0x20] sm:$0xf] %v890
        %923 = vst [vmem:[%s290 + $0x24] sm:$0xf] %v891
        %924 = vst [vmem:[%s290 + $0x28] sm:$0xf] %v892
        %925 = vst [vmem:[%s290 + $0x2c] sm:$0xf] %v893
        %926 = vst [vmem:[%s290 + $0x30] sm:$0xf] %v894
        %927 = vst [vmem:[%s290 + $0x34] sm:$0xf] %v895
        %928 = vst [vmem:[%s290 + $0x38] sm:$0xf] %v896
        %929 = vst [vmem:[%s290 + $0x3c] sm:$0xf] %v897
        %v938 = vunpack.c.l.b16 %v764
        %v939 = vunpack.c.h.b16 %v764
        %v940 = vunpack.c.l.b16 %v767
        %v941 = vunpack.c.h.b16 %v767
        %v942 = vunpack.c.l.b16 %v770
        %v943 = vunpack.c.h.b16 %v770
        %v944 = vunpack.c.l.b16 %v773
        %v945 = vunpack.c.h.b16 %v773
        %v946 = vunpack.c.l.b16 %v776
        %v947 = vunpack.c.h.b16 %v776
        %v948 = vunpack.c.l.b16 %v779
        %v949 = vunpack.c.h.b16 %v779
        %v950 = vunpack.c.l.b16 %v782
        %v951 = vunpack.c.h.b16 %v782
        %v952 = vunpack.c.l.b16 %v785
        %v953 = vunpack.c.h.b16 %v785
        %v954 = vpack.c.b16 %v938, %v938
        %v955 = vpack.c.b16 %v939, %v939
        %v956 = vpack.c.b16 %v940, %v940
        %v957 = vpack.c.b16 %v941, %v941
        %v958 = vpack.c.b16 %v942, %v942
        %v959 = vpack.c.b16 %v943, %v943
        %v960 = vpack.c.b16 %v944, %v944
        %v961 = vpack.c.b16 %v945, %v945
        %v962 = vpack.c.b16 %v946, %v946
        %v963 = vpack.c.b16 %v947, %v947
        %v964 = vpack.c.b16 %v948, %v948
        %v965 = vpack.c.b16 %v949, %v949
        %v966 = vpack.c.b16 %v950, %v950
        %v967 = vpack.c.b16 %v951, %v951
        %v968 = vpack.c.b16 %v952, %v952
        %v969 = vpack.c.b16 %v953, %v953
        %986 = vst [vmem:[%s297] sm:$0xf] %v954
        %987 = vst [vmem:[%s297 + $0x4] sm:$0xf] %v955
        %988 = vst [vmem:[%s297 + $0x8] sm:$0xf] %v956
        %989 = vst [vmem:[%s297 + $0xc] sm:$0xf] %v957
        %990 = vst [vmem:[%s297 + $0x10] sm:$0xf] %v958
        %991 = vst [vmem:[%s297 + $0x14] sm:$0xf] %v959
        %992 = vst [vmem:[%s297 + $0x18] sm:$0xf] %v960
        %993 = vst [vmem:[%s297 + $0x1c] sm:$0xf] %v961
        %994 = vst [vmem:[%s297 + $0x20] sm:$0xf] %v962
        %995 = vst [vmem:[%s297 + $0x24] sm:$0xf] %v963
        %996 = vst [vmem:[%s297 + $0x28] sm:$0xf] %v964
        %997 = vst [vmem:[%s297 + $0x2c] sm:$0xf] %v965
        %998 = vst [vmem:[%s297 + $0x30] sm:$0xf] %v966
        %999 = vst [vmem:[%s297 + $0x34] sm:$0xf] %v967
        %1000 = vst [vmem:[%s297 + $0x38] sm:$0xf] %v968
        %1001 = vst [vmem:[%s297 + $0x3c] sm:$0xf] %v969
        %s1002 = sand.u32 %s119, 1
        %s1003 = scalar_lea.sflag [#allocation4], %s1002
        %s1004 = sand.u32 %s119, 1
        %s1005 = smul.addr %s1004, 64
        %s1006 = scalar_lea.vmem [#allocation7], %s1005
        %s1007 = sand.u32 %s27, 1
        %s1008 = scalar_lea.sflag [#allocation9], %s1007
        %s1009 = sand.u32 %s147, 1
        %s1010 = smul.addr %s1009, 64
        %s1011 = scalar_lea.vmem [#allocation8], %s1010
        %s1012 = sand.u32 %s27, 1
        %s1013 = scalar_lea.sflag [#allocation9], %s1012
        %s1014 = sand.u32 %s175, 1
        %s1015 = smul.addr %s1014, 64
        %s1016 = scalar_lea.vmem [#allocation10], %s1015
        // Predicated region
        $region41: #{tpu_custom_call.1} parent=31 // pred_check
          %p1017 = pneg %p129
        $region42: #{tpu_custom_call.1} parent=31 // pred_check_branch
          %1019 = sbr.rel (%p1017) target = $region44
        $region43: #{tpu_custom_call.1} parent=31 // pred_region
          %s1020 = smul.u32 16, %s32
          %s1022 = ssub.s32 1024, 1024
          %1023 = vsyncadd %s1003, %s1022
          %s1024 = smul.addr %s31, 16
          %s1025 = sadd.s32 %s1020, %s1024
          %s1026 = smul.addr %s1025, 64
          %s1027 = scalar_lea.hbm %s3, %s1026
          %s1028 = sshll.u32 %s1006, 4
          %s1029 = int_to_ptr.vmem [resolvable:$true] %s1028
          %1034 = dma.vmem_to_hbm [thread:$0]  %s1029, 1024, %s1027, %s1003, 64, 64, 4
        $region44: #{tpu_custom_call.1} parent=31 // pred_fallthru
          _
        // Predicated region
        $region45: #{tpu_custom_call.1} parent=31 // pred_check
          %p1035 = pneg %p157
        $region46: #{tpu_custom_call.1} parent=31 // pred_check_branch
          %1037 = sbr.rel (%p1035) target = $region48
        $region47: #{tpu_custom_call.1} parent=31 // pred_region
          %s1038 = smul.u32 16, %s32
          %s1040 = ssub.s32 1024, 1024
          %1041 = vsyncadd %s1008, %s1040
          %s1042 = smul.addr %s31, 16
          %s1043 = sadd.s32 %s1038, %s1042
          %s1044 = smul.addr %s1043, 64
          %s1045 = scalar_lea.hbm %s4, %s1044
          %s1046 = sshll.u32 %s1011, 4
          %s1047 = int_to_ptr.vmem [resolvable:$true] %s1046
          %1052 = dma.vmem_to_hbm [thread:$0]  %s1047, 1024, %s1045, %s1008, 64, 64, 4
        $region48: #{tpu_custom_call.1} parent=31 // pred_fallthru
          _
        // Predicated region
        $region49: #{tpu_custom_call.1} parent=31 // pred_check
          %p1053 = pneg %p185
        $region50: #{tpu_custom_call.1} parent=31 // pred_check_branch
          %1055 = sbr.rel (%p1053) target = $region52
        $region51: #{tpu_custom_call.1} parent=31 // pred_region
          %s1056 = smul.u32 16, %s32
          %s1058 = ssub.s32 1024, 1024
          %1059 = vsyncadd %s1013, %s1058
          %s1060 = smul.addr %s31, 16
          %s1061 = sadd.s32 %s1056, %s1060
          %s1062 = smul.addr %s1061, 64
          %s1063 = scalar_lea.hbm %s5, %s1062
          %s1064 = sshll.u32 %s1016, 4
          %s1065 = int_to_ptr.vmem [resolvable:$true] %s1064
          %1070 = dma.vmem_to_hbm [thread:$0]  %s1065, 1024, %s1063, %s1013, 64, 64, 4
        $region52: #{tpu_custom_call.1} parent=31 // pred_fallthru
          _
      $region32: #{tpu_custom_call.1} parent=5 // pred_fallthru
        _
      %p1071 = scmp.le.s32.totalorder 2, %s22
      // Predicated region
      $region53: #{tpu_custom_call.1} parent=5 // pred_check
        %p1072 = pneg %p1071
      $region54: #{tpu_custom_call.1} parent=5 // pred_check_branch
        %1074 = sbr.rel (%p1072) target = $region56
      $region55: #{tpu_custom_call.1} parent=5 // pred_region
        %s1075 = ssub.s32 %s22, 2
        // Predicated region
        $region57: #{tpu_custom_call.1} parent=55 // pred_check
          %p1076 = pneg %p135
        $region58: #{tpu_custom_call.1} parent=55 // pred_check_branch
          %1078 = sbr.rel (%p1076) target = $region60
        $region59: #{tpu_custom_call.1} parent=55 // pred_region
          %s1079 = sand.u32 %s120, 1
          %s1080 = scalar_lea.sflag [#allocation4], %s1079
          %s1081 = sand.u32 %s120, 1
          %s1082 = smul.addr %s1081, 64
          %s1083 = scalar_lea.vmem [#allocation7], %s1082
          %1084 = dma.done %s1080, 1024
        $region60: #{tpu_custom_call.1} parent=55 // pred_fallthru
          _
        // Predicated region
        $region61: #{tpu_custom_call.1} parent=55 // pred_check
          %p1085 = pneg %p163
        $region62: #{tpu_custom_call.1} parent=55 // pred_check_branch
          %1087 = sbr.rel (%p1085) target = $region64
        $region63: #{tpu_custom_call.1} parent=55 // pred_region
          %s1088 = sand.u32 %s28, 1
          %s1089 = scalar_lea.sflag [#allocation9], %s1088
          %s1090 = sand.u32 %s148, 1
          %s1091 = smul.addr %s1090, 64
          %s1092 = scalar_lea.vmem [#allocation8], %s1091
          %1093 = dma.done %s1089, 1024
        $region64: #{tpu_custom_call.1} parent=55 // pred_fallthru
          _
        // Predicated region
        $region65: #{tpu_custom_call.1} parent=55 // pred_check
          %p1094 = pneg %p191
        $region66: #{tpu_custom_call.1} parent=55 // pred_check_branch
          %1096 = sbr.rel (%p1094) target = $region68
        $region67: #{tpu_custom_call.1} parent=55 // pred_region
          %s1097 = sand.u32 %s28, 1
          %s1098 = scalar_lea.sflag [#allocation9], %s1097
          %s1099 = sand.u32 %s176, 1
          %s1100 = smul.addr %s1099, 64
          %s1101 = scalar_lea.vmem [#allocation10], %s1100
          %1102 = dma.done %s1098, 1024
        $region68: #{tpu_custom_call.1} parent=55 // pred_fallthru
          _
      $region56: #{tpu_custom_call.1} parent=5 // pred_fallthru
        _
    $region6: #{tpu_custom_call.1} parent=1 // loop_footer
      %s26 = sadd.s32 1, %s22
    $region7: #{tpu_custom_call.1} parent=1 // loop_footer_branch
      %21 = sbr.rel target = $region3
    $region8: #{tpu_custom_call.1} parent=1 // loop_exit
      _
    %1103 = vsyncpa [#allocation3], 1
    %s1104 = scalar_lea.sflag [#allocation3], 1
    %1105 = vsyncpa %s1104, 1
    %1106 = vsyncpa [#allocation6], 1
    %1107 = vsyncpa [#allocation4], 1
    %s1108 = scalar_lea.sflag [#allocation4], 1
    %1109 = vsyncpa %s1108, 1
    %1110 = vsyncpa [#allocation9], 1
    %s1111 = scalar_lea.sflag [#allocation9], 1
    %1112 = vsyncpa %s1111, 1

</llo_original>
